<compile_context>
chip_gen: v5e
topology: v5e:2x2
jax: 0.10.0
libtpu: 0.0.40
codegen_flags: <defaults>
</compile_context>

<pallas_src>
import jax
import jax.numpy as jnp
from jax.experimental import pallas as pl
from jax.experimental.pallas import tpu as pltpu


def mycell_kernel(xh_ref, wb_ref, o_ref):
    """Fused Linear -> decision-gate -> residual add -> tanh (single step).

    xh_ref: (2, B, F)     packed [x; h]  (x = xh[0], h = xh[1])
    wb_ref: (IN+1, OUT)   rows 0..IN-1 = W^T, row IN = bias
    o_ref:  (B, OUT)      new hidden state
    """
    x = xh_ref[0].astype(jnp.float32)          # (B, IN)
    h = xh_ref[1].astype(jnp.float32)          # (B, OUT)
    wb = wb_ref[...].astype(jnp.float32)       # (IN+1, OUT)

    B = x.shape[0]
    in_features = wb.shape[0] - 1
    out_features = wb.shape[1]

    # Bias row folded into the accumulator init (sublane broadcast, no final add).
    y = jnp.broadcast_to(wb[in_features:in_features + 1, :], (B, out_features))

    # torch.nn.Linear as an unrolled VPU broadcast multiply-add:
    #   y[b, o] += x[b, i] * Wt[i, o]   for i in 0..IN-1   (IN == 4, static)
    # Keeps this tiny matmul entirely off the MXU (no vmatmul/result-FIFO latency).
    for i in range(in_features):
        y = y + x[:, i:i + 1] * wb[i:i + 1, :]

    # MyDecisionGate: y if y.sum() > 0 else -y, as one reduction + sign factor
    # (single select, single multiply; y and -y never both materialized).
    s = jnp.sum(y)
    scale = jnp.where(s > 0.0, jnp.float32(1.0), jnp.float32(-1.0))

    # new_h = tanh(gate(y) + h)   (tanh rides the EUP slot)
    o_ref[...] = jnp.tanh(y * scale + h).astype(o_ref.dtype)


def mycell_prepare_params(w, b):
    """One-time parameter prep (call at module init, NOT per forward step).

    w: (out_features, in_features) PyTorch nn.Linear layout
    b: (out_features,)
    Returns wb: (in_features + 1, out_features) = [W^T; b].
    """
    out_features = w.shape[0]
    return jnp.concatenate([w.T, b.reshape(1, out_features)], axis=0)


def mycell_forward(x, h, wb):
    """Single-step MyCell forward in one single-block Pallas call.

    x, h: (B, F);  wb: pre-prepared (F+1, F) from mycell_prepare_params.
    Returns (new_h, new_h) to match the module's tuple output.
    """
    B, _ = x.shape
    out_features = wb.shape[1]

    # Pack x and h into one VMEM block: 2 input DMAs total instead of 4.
    xh = jnp.stack([x, h], axis=0)            # (2, B, F)

    # TODO(synk): if this cell is ever driven over T timesteps, move the time
    # loop inside the kernel (grid axis 'arbitrary', wb resident in VMEM, h in
    # VMEM scratch, h aliased via input_output_aliases) to amortize per-call
    # and weight-DMA overhead; the module's forward here is a single step.
    new_h = pl.pallas_call(
        mycell_kernel,
        out_shape=jax.ShapeDtypeStruct((B, out_features), x.dtype),
        in_specs=[
            pl.BlockSpec(memory_space=pltpu.VMEM),  # packed [x; h]
            pl.BlockSpec(memory_space=pltpu.VMEM),  # packed [W^T; b]
        ],
        out_specs=pl.BlockSpec(memory_space=pltpu.VMEM),
    )(xh, wb)

    return new_h, new_h


if __name__ == "__main__":
    key = jax.random.PRNGKey(0)
    kx, kh, kw, kb = jax.random.split(key, 4)

    B, F = 3, 4  # tutorial uses torch.rand(3, 4) for both x and h

    x = jax.random.uniform(kx, (B, F), dtype=jnp.float32)
    h = jax.random.uniform(kh, (B, F), dtype=jnp.float32)

    # Deterministic "Linear(4, 4)" parameters (PyTorch layout: (out, in)).
    bound = 1.0 / jnp.sqrt(jnp.float32(F))
    w = jax.random.uniform(kw, (F, F), minval=-bound, maxval=bound,
                           dtype=jnp.float32)
    b = jax.random.uniform(kb, (F,), minval=-bound, maxval=bound,
                           dtype=jnp.float32)

    # Hoisted one-time parameter prep (would live at module __init__).
    wb = mycell_prepare_params(w, b)
    wb = jax.block_until_ready(wb)

    new_h, new_h2 = mycell_forward(x, h, wb)
    jax.block_until_ready(new_h)
    jax.block_until_ready(new_h2)

    # Cross-check against a pure-JAX reference of the same forward pass.
    y_ref = x @ w.T + b
    gated_ref = jnp.where(jnp.sum(y_ref) > 0.0, y_ref, -y_ref)
    expected = jnp.tanh(gated_ref + h)
    assert jnp.allclose(new_h, expected, atol=1e-5, rtol=1e-5)
    assert jnp.array_equal(new_h, new_h2)

    print("KERNEL_OK")
</pallas_src>

<mosaic_0001>
module attributes {stable_mosaic.version = 11 : i64} {
  func.func @mycell_kernel(%arg0: memref<2x3x4xf32, #tpu.memory_space<vmem>>, %arg1: memref<5x4xf32, #tpu.memory_space<vmem>>, %arg2: memref<3x4xf32, #tpu.memory_space<vmem>>) attributes {dimension_semantics = [], scalar_prefetch = 0 : i64, scratch_operands = 0 : i64, tpu.core_type = #tpu.core_type<tc>} {
    %c0 = arith.constant 0 : index
    %c0_0 = arith.constant 0 : index
    %c0_1 = arith.constant 0 : index
    %0 = vector.load %arg0[%c0, %c0_0, %c0_1] : memref<2x3x4xf32, #tpu.memory_space<vmem>>, vector<1x3x4xf32>
    %1 = vector.shape_cast %0 : vector<1x3x4xf32> to vector<3x4xf32>
    %c1 = arith.constant 1 : index
    %c0_2 = arith.constant 0 : index
    %c0_3 = arith.constant 0 : index
    %2 = vector.load %arg0[%c1, %c0_2, %c0_3] : memref<2x3x4xf32, #tpu.memory_space<vmem>>, vector<1x3x4xf32>
    %3 = vector.shape_cast %2 : vector<1x3x4xf32> to vector<3x4xf32>
    %c0_4 = arith.constant 0 : index
    %c0_5 = arith.constant 0 : index
    %4 = vector.load %arg1[%c0_4, %c0_5] : memref<5x4xf32, #tpu.memory_space<vmem>>, vector<5x4xf32>
    %5 = vector.extract_strided_slice %4 {offsets = [4, 0], sizes = [1, 4], strides = [1, 1]} : vector<5x4xf32> to vector<1x4xf32>
    %6 = vector.shape_cast %5 : vector<1x4xf32> to vector<1x4xf32>
    %7 = vector.broadcast %6 : vector<1x4xf32> to vector<3x4xf32>
    %8 = vector.extract_strided_slice %1 {offsets = [0, 0], sizes = [3, 1], strides = [1, 1]} : vector<3x4xf32> to vector<3x1xf32>
    %9 = vector.extract_strided_slice %4 {offsets = [0, 0], sizes = [1, 4], strides = [1, 1]} : vector<5x4xf32> to vector<1x4xf32>
    %10 = vector.broadcast %8 : vector<3x1xf32> to vector<3x4xf32>
    %11 = vector.broadcast %9 : vector<1x4xf32> to vector<3x4xf32>
    %12 = arith.mulf %10, %11 : vector<3x4xf32>
    %13 = arith.addf %7, %12 : vector<3x4xf32>
    %14 = vector.extract_strided_slice %1 {offsets = [0, 1], sizes = [3, 1], strides = [1, 1]} : vector<3x4xf32> to vector<3x1xf32>
    %15 = vector.extract_strided_slice %4 {offsets = [1, 0], sizes = [1, 4], strides = [1, 1]} : vector<5x4xf32> to vector<1x4xf32>
    %16 = vector.broadcast %14 : vector<3x1xf32> to vector<3x4xf32>
    %17 = vector.broadcast %15 : vector<1x4xf32> to vector<3x4xf32>
    %18 = arith.mulf %16, %17 : vector<3x4xf32>
    %19 = arith.addf %13, %18 : vector<3x4xf32>
    %20 = vector.extract_strided_slice %1 {offsets = [0, 2], sizes = [3, 1], strides = [1, 1]} : vector<3x4xf32> to vector<3x1xf32>
    %21 = vector.extract_strided_slice %4 {offsets = [2, 0], sizes = [1, 4], strides = [1, 1]} : vector<5x4xf32> to vector<1x4xf32>
    %22 = vector.broadcast %20 : vector<3x1xf32> to vector<3x4xf32>
    %23 = vector.broadcast %21 : vector<1x4xf32> to vector<3x4xf32>
    %24 = arith.mulf %22, %23 : vector<3x4xf32>
    %25 = arith.addf %19, %24 : vector<3x4xf32>
    %26 = vector.extract_strided_slice %1 {offsets = [0, 3], sizes = [3, 1], strides = [1, 1]} : vector<3x4xf32> to vector<3x1xf32>
    %27 = vector.extract_strided_slice %4 {offsets = [3, 0], sizes = [1, 4], strides = [1, 1]} : vector<5x4xf32> to vector<1x4xf32>
    %28 = vector.broadcast %26 : vector<3x1xf32> to vector<3x4xf32>
    %29 = vector.broadcast %27 : vector<1x4xf32> to vector<3x4xf32>
    %30 = arith.mulf %28, %29 : vector<3x4xf32>
    %31 = arith.addf %25, %30 : vector<3x4xf32>
    %32 = vector.shape_cast %31 : vector<3x4xf32> to vector<1x3x4xf32>
    %cst = arith.constant dense<0.000000e+00> : vector<1xf32>
    %33 = vector.multi_reduction <add>, %32, %cst [1, 2] : vector<1x3x4xf32> to vector<1xf32>
    %34 = vector.shape_cast %33 : vector<1xf32> to vector<1x1x1xf32>
    %35 = vector.extract %34[0, 0, 0] : f32 from vector<1x1x1xf32>
    %cst_6 = arith.constant 0.000000e+00 : f32
    %36 = arith.cmpf ogt, %35, %cst_6 : f32
    %cst_7 = arith.constant 1.000000e+00 : f32
    %cst_8 = arith.constant -1.000000e+00 : f32
    %37 = arith.select %36, %cst_7, %cst_8 : f32
    %38 = vector.broadcast %37 : f32 to vector<3x4xf32>
    %39 = arith.mulf %31, %38 : vector<3x4xf32>
    %40 = arith.addf %39, %3 : vector<3x4xf32>
    %41 = math.tanh %40 : vector<3x4xf32>
    %c0_9 = arith.constant 0 : index
    %c0_10 = arith.constant 0 : index
    %42 = vector.load %arg2[%c0_9, %c0_10] : memref<3x4xf32, #tpu.memory_space<vmem>>, vector<3x4xf32>
    tpu.vector_store %arg2[%c0_9, %c0_10], %41 {strides = array<i32>} : memref<3x4xf32, #tpu.memory_space<vmem>>, vector<3x4xf32>,
    return
  }
}

</mosaic_0001>

<llo_original>
// kernel: tpu_custom_call.1
$region0: #{tpu_custom_call.1}
  #allocation0 [shape = 'u32[]', space=smem, size = 0x4, offset = 0x4, fixed_abs, tag = 'smem constant byte address 0x4 - core index']
  #allocation1 [shape = 'u32[72,128]{1,0:T(1,128)}', space=vmem, size = 0x9000, scoped, tag = 'internal scratch']
  %s0 = inlined_call_operand.vmem [shape: f32[2,3,4], index: 0, kind: input, shape index: {}]
  %s1 = inlined_call_operand.vmem [shape: f32[5,4], index: 1, kind: input, shape index: {}]
  %s2 = inlined_call_operand.hbm [shape: f32[3,4], index: 2, kind: output, shape index: {}]
  %s3 = sld [smem:[#allocation0]]
  $region18: #{tpu_custom_call.1} parent=0
    _
  %s5 = ssub.s32 1, %s3
  %s6 = scalar_select 0, %s5, %s3
  $region1: #{tpu_custom_call.1} parent=0
    #allocation2 [shape = 'u8[2048]{0}', space=vmem, size = 0x800, scoped, tag = 'output window, operand 0, single buffered']
    #allocation3 [shape = 's32[1]{0}', space=sflag, size = 0x4, scoped, tag = 'scoped memory for tpu_custom_call.1']
    %7 = vsyncpa [#allocation3], 0
    // Predicated region
    $region2: #{tpu_custom_call.1} parent=1 // pred_check
      _
    $region3: #{tpu_custom_call.1} parent=1 // pred_check_branch
      %9 = sbr.rel (0) target = $region5
    $region4: #{tpu_custom_call.1} parent=1 // pred_region
      _
    $region5: #{tpu_custom_call.1} parent=1 // pred_fallthru
      _
    // Predicated region
    $region6: #{tpu_custom_call.1} parent=1 // pred_check
      _
    $region7: #{tpu_custom_call.1} parent=1 // pred_check_branch
      %11 = sbr.rel (0) target = $region9
    $region8: #{tpu_custom_call.1} parent=1 // pred_region
      _
    $region9: #{tpu_custom_call.1} parent=1 // pred_fallthru
      _
    %v12 = vld [vmem:[%s0] sm:$0x7]
    %s13 = scalar_lea.vmem %s0, 4
    %v14 = vld [vmem:[%s13] sm:$0x7]
    %v15 = vld [vmem:[%s1] sm:$0x1f]
    %v16 = vperm.slane %v15, 4
    %18 = vset.pattern.permute.xlu0 0
    %19 = vperm.xlu0 %18, %v12
    %v20 = vpop.permute.xlu0 %19
    %v22 = vperm.slane %v15, 0
    %v23 = vmul.f32 %v20, %v22
    %v24 = vadd.f32 %v16, %v23
    %25 = vset.pattern.permute.xlu0 1
    %26 = vperm.xlu0 %25, %v12
    %v27 = vpop.permute.xlu0 %26
    %v29 = vperm.slane %v15, 1
    %v30 = vmul.f32 %v27, %v29
    %v31 = vadd.f32 %v24, %v30
    %32 = vset.pattern.permute.xlu0 2
    %33 = vperm.xlu0 %32, %v12
    %v34 = vpop.permute.xlu0 %33
    %v36 = vperm.slane %v15, 2
    %v37 = vmul.f32 %v34, %v36
    %v38 = vadd.f32 %v31, %v37
    %39 = vset.pattern.permute.xlu0 3
    %40 = vperm.xlu0 %39, %v12
    %v41 = vpop.permute.xlu0 %40
    %v43 = vperm.slane %v15, 3
    %v44 = vmul.f32 %v41, %v43
    %v45 = vadd.f32 %v38, %v44
    %vm46 = vcmask 26624
    %v47 = vsel %vm46, %v45, 0.0
    %48 = vadd.xlane.f32.xlu0 %v47
    %v49 = vpop.xlane.xlu0 %48
    %v50 = vrot.slane %v49, 4
    %v51 = vadd.f32 %v49, %v50
    %v52 = vrot.slane %v51, 2
    %v53 = vadd.f32 %v51, %v52
    %v54 = vrot.slane %v53, 1
    %v55 = vadd.f32 %v53, %v54
    %s56 = vtos %v55
    %p57 = scmp.gt.f32.partialorder %s56, 0.0
    %s58 = scalar_select %p57, 1.0, -1.0
    %v59 = vstv %s58
    %v60 = vmul.f32 %v45, %v59
    %v61 = vadd.f32 %v60, %v14
    %v62 = vtanh.pop %v61
    %63 = vst.msk [vmem:[#allocation2] sm:$0x7] %vm46, %v62
    // Predicated region
    $region10: #{tpu_custom_call.1} parent=1 // pred_check
      _
    $region11: #{tpu_custom_call.1} parent=1 // pred_check_branch
      %65 = sbr.rel (0) target = $region13
    $region12: #{tpu_custom_call.1} parent=1 // pred_region
      %67 = vsyncadd [#allocation3], 0
      %s69 = sshll.u32 [#allocation2], 4
      %s70 = int_to_ptr.vmem [resolvable:$true] %s69
      %s71 = sshll.u32 %s2, 4
      %s72 = int_to_ptr.hbm [resolvable:$true] %s71
      %74 = dma.vmem_to_hbm [thread:$0]  %s70, 64, %s72, [#allocation3]
    $region13: #{tpu_custom_call.1} parent=1 // pred_fallthru
      _
    // Predicated region
    $region14: #{tpu_custom_call.1} parent=1 // pred_check
      _
    $region15: #{tpu_custom_call.1} parent=1 // pred_check_branch
      %76 = sbr.rel (0) target = $region17
    $region16: #{tpu_custom_call.1} parent=1 // pred_region
      %78 = dma.done [#allocation3], 64
    $region17: #{tpu_custom_call.1} parent=1 // pred_fallthru
      _
    %79 = vsyncpa [#allocation3], 1

</llo_original>
